<compile_context>
chip_gen: v6e
topology: v6e:2x2x1
jax: 0.10.0
libtpu: 0.0.40
codegen_flags: <defaults>
</compile_context>

<pallas_src>
import functools

import jax
import jax.numpy as jnp
from jax import lax
from jax.experimental import pallas as pl
from jax.experimental.pallas import tpu as pltpu

_LANE = 128


def _round_up(x, m):
    return (x + m - 1) // m * m


# --------------------------------------------------------------------------
# One-time parameter preparation (do NOT call per forward).
# --------------------------------------------------------------------------
def prepare_fused_params(w_scorer, b_scorer, w_resid, b_resid, *, param_dtype=None):
    """Fuse the two linears into one lane-dense [F, N_pad] weight + [1, N_pad] f32 bias.

    w_scorer: [F, C], w_resid: [F, R]   (already stored transposed, i.e. [in, out]).
    biases: [C] / [1, C] and [R] / [1, R].
    """
    in_dim, n_concepts = w_scorer.shape
    residual_size = w_resid.shape[1]
    n_out = n_concepts + residual_size
    n_pad = _round_up(n_out, _LANE)
    param_dtype = param_dtype or w_scorer.dtype

    w = jnp.zeros((in_dim, n_pad), param_dtype)
    w = w.at[:, :n_concepts].set(w_scorer.astype(param_dtype))
    w = w.at[:, n_concepts:n_out].set(w_resid.astype(param_dtype))

    b = jnp.zeros((1, n_pad), jnp.float32)
    b = b.at[:, :n_concepts].set(b_scorer.reshape(1, n_concepts).astype(jnp.float32))
    b = b.at[:, n_concepts:n_out].set(b_resid.reshape(1, residual_size).astype(jnp.float32))

    return {"w": w, "b": b, "n_concepts": n_concepts, "residual_size": residual_size}


# --------------------------------------------------------------------------
# Kernel: one fused MXU matmul + f32 bias + masked sigmoid epilogue.
# --------------------------------------------------------------------------
def _bottleneck_kernel(x_ref, w_ref, b_ref, out_ref, *, n_concepts):
    # [TB, F] @ [F, N_pad] with f32 accumulation on the MXU.
    y = jnp.dot(x_ref[...], w_ref[...], preferred_element_type=jnp.float32)
    y = y + b_ref[...]                                  # f32 bias, broadcasts over rows
    # Sigmoid only on the concept lanes; residual / pad lanes stay linear.
    col = lax.broadcasted_iota(jnp.int32, (1, y.shape[1]), 1)
    y = jnp.where(col < n_concepts, jax.nn.sigmoid(y), y)
    out_ref[...] = y.astype(out_ref.dtype)


# --------------------------------------------------------------------------
# Forward wrapper.
# --------------------------------------------------------------------------
def concept_residual_bottleneck(x, params, c_true=None, intervention_idxs=None,
                                intervention_rate=0.0, *, compute_dtype=None,
                                out_dtype=None, vmem_budget_bytes=40 << 20,
                                max_batch_tile=2048):
    """x: [B, F]; params from prepare_fused_params()."""
    w, b = params["w"], params["b"]
    n_concepts = params["n_concepts"]
    residual_size = params["residual_size"]

    B, in_dim = x.shape
    n_pad = w.shape[1]
    n_out = n_concepts + residual_size

    compute_dtype = compute_dtype or x.dtype
    out_dtype = out_dtype or x.dtype
    if x.dtype != compute_dtype:
        x = x.astype(compute_dtype)
    if w.dtype != compute_dtype:
        # Prefer preparing params already in compute_dtype to avoid this per-call cast.
        w = w.astype(compute_dtype)

    bytes_op = jnp.dtype(compute_dtype).itemsize
    bytes_out = jnp.dtype(out_dtype).itemsize

    # --- batch tile from VMEM budget (single-buffered weights, double-buffered x/out) ---
    weight_bytes = in_dim * n_pad * bytes_op + n_pad * 4
    per_row_bytes = 2 * (in_dim * bytes_op + n_pad * bytes_out)
    tb_budget = max(8, ((vmem_budget_bytes - weight_bytes) // per_row_bytes) // 8 * 8)
    b_pad8 = _round_up(B, 8)
    tb = min(tb_budget, max_batch_tile, b_pad8)
    if b_pad8 >= 4 * 8:
        # >=4 grid steps -> >=2 per TensorCore on v7x, and the DMA pipeline stays full.
        tb = min(tb, _round_up(pl.cdiv(b_pad8, 4), 8))
    tb = max(tb, 8)
    grid = (pl.cdiv(B, tb),)

    cost = pl.CostEstimate(
        flops=2 * B * in_dim * n_pad,
        transcendentals=B * n_pad,
        bytes_accessed=B * in_dim * bytes_op + in_dim * n_pad * bytes_op
                       + n_pad * 4 + B * n_pad * bytes_out,
    )

    out_padded = pl.pallas_call(
        functools.partial(_bottleneck_kernel, n_concepts=n_concepts),
        out_shape=jax.ShapeDtypeStruct((B, n_pad), out_dtype),
        grid=grid,
        in_specs=[
            # x tile: double-buffered (default) over the batch grid.
            pl.BlockSpec((tb, in_dim), lambda i: (i, 0)),
            # Fused weight / bias: grid-invariant -> single-buffered, VMEM-resident.
            pl.BlockSpec((in_dim, n_pad), lambda i: (0, 0), pipeline_mode=pl.Buffered(1)),
            pl.BlockSpec((1, n_pad), lambda i: (0, 0), pipeline_mode=pl.Buffered(1)),
        ],
        out_specs=pl.BlockSpec((tb, n_pad), lambda i: (i, 0)),
        compiler_params=pltpu.CompilerParams(
            dimension_semantics=("parallel",),            # shard batch across TCs on v7x
            vmem_limit_bytes=int(vmem_budget_bytes + (16 << 20)),
        ),
        cost_estimate=cost,
    )(x, w, b)

    # Narrow views of the fused slab (these are XLA copies; consume 'next_padded'
    # downstream if you care about the extra output-path bandwidth).
    c_pred = out_padded[:, :n_concepts]
    emb = out_padded[:, n_concepts:n_out]
    nxt = out_padded[:, :n_out]

    if c_true is not None and intervention_idxs is not None:
        c_int = jnp.where(intervention_idxs, c_true.astype(c_pred.dtype), c_pred)
    else:
        # TODO(synk): intervention_rate-based stochastic interventions (intervene()
        # with a rate but no explicit idxs) are not implemented; identity fallback.
        c_int = c_pred

    return {"next": nxt, "c_pred": c_pred, "c_int": c_int, "emb": emb,
            "next_padded": out_padded}


if __name__ == "__main__":
    key = jax.random.PRNGKey(0)
    keys = jax.random.split(key, 10)

    # ------------------ small test (f32 operands, single tile) ------------------
    batch, in_features, n_concepts, residual_size = 8, 32, 4, 8
    x = jax.random.normal(keys[0], (batch, in_features), jnp.float32)
    w_scorer = jax.random.normal(keys[1], (in_features, n_concepts), jnp.float32) * 0.1
    b_scorer = jax.random.normal(keys[2], (1, n_concepts), jnp.float32) * 0.1
    w_resid = jax.random.normal(keys[3], (in_features, residual_size), jnp.float32) * 0.1
    b_resid = jax.random.normal(keys[4], (1, residual_size), jnp.float32) * 0.1

    params = prepare_fused_params(w_scorer, b_scorer, w_resid, b_resid)
    out = concept_residual_bottleneck(x, params)
    jax.block_until_ready(out)

    c_logit_ref = jnp.dot(x, w_scorer, precision=lax.Precision.HIGHEST) + b_scorer
    c_pred_ref = jax.nn.sigmoid(c_logit_ref)
    emb_ref = jnp.dot(x, w_resid, precision=lax.Precision.HIGHEST) + b_resid
    next_ref = jnp.concatenate([c_pred_ref, emb_ref], axis=-1)

    assert out["c_pred"].shape == (batch, n_concepts)
    assert out["emb"].shape == (batch, residual_size)
    assert out["next"].shape == (batch, n_concepts + residual_size)
    assert jnp.allclose(out["c_pred"], c_pred_ref, atol=1e-4, rtol=1e-4)
    assert jnp.allclose(out["emb"], emb_ref, atol=1e-4, rtol=1e-4)
    assert jnp.allclose(out["next"], next_ref, atol=1e-4, rtol=1e-4)
    assert jnp.allclose(out["c_int"], out["c_pred"])

    # Explicit intervention path ('next' uses c_pred, so it must be unchanged).
    c_true = jnp.ones((batch, n_concepts), jnp.float32)
    idxs = jnp.zeros((batch, n_concepts), bool).at[:, 0].set(True)
    out_i = concept_residual_bottleneck(x, params, c_true=c_true, intervention_idxs=idxs)
    jax.block_until_ready(out_i)
    assert jnp.allclose(out_i["c_int"][:, 0], 1.0)
    assert jnp.allclose(out_i["c_int"][:, 1:], out_i["c_pred"][:, 1:])
    assert jnp.allclose(out_i["next"], out["next"])

    # --------- larger test: multi-tile batch, partial last tile, N_pad > 128, bf16 ---------
    B2, F2, C2, R2 = 300, 160, 40, 100
    x2 = jax.random.normal(keys[5], (B2, F2), jnp.float32)
    ws2 = jax.random.normal(keys[6], (F2, C2), jnp.float32) * 0.1
    bs2 = jax.random.normal(keys[7], (1, C2), jnp.float32) * 0.1
    wr2 = jax.random.normal(keys[8], (F2, R2), jnp.float32) * 0.1
    br2 = jax.random.normal(keys[9], (1, R2), jnp.float32) * 0.1

    params2 = prepare_fused_params(ws2, bs2, wr2, br2, param_dtype=jnp.bfloat16)
    out2 = concept_residual_bottleneck(x2, params2, compute_dtype=jnp.bfloat16)
    jax.block_until_ready(out2)

    c_pred2_ref = jax.nn.sigmoid(jnp.dot(x2, ws2, precision=lax.Precision.HIGHEST) + bs2)
    emb2_ref = jnp.dot(x2, wr2, precision=lax.Precision.HIGHEST) + br2
    next2_ref = jnp.concatenate([c_pred2_ref, emb2_ref], axis=-1)

    assert out2["next"].shape == (B2, C2 + R2)
    assert jnp.allclose(out2["c_pred"], c_pred2_ref, atol=1e-1, rtol=1e-1)
    assert jnp.allclose(out2["emb"], emb2_ref, atol=1e-1, rtol=1e-1)
    assert jnp.allclose(out2["next"], next2_ref, atol=1e-1, rtol=1e-1)

    print("KERNEL_OK")
</pallas_src>

<mosaic_0001>
module attributes {stable_mosaic.version = 11 : i64} {
  func.func @_bottleneck_kernel(%arg0: i32, %arg1: memref<8x32xf32, #tpu.memory_space<vmem>>, %arg2: memref<32x128xf32, #tpu.memory_space<vmem>>, %arg3: memref<1x128xf32, #tpu.memory_space<vmem>>, %arg4: memref<8x128xf32, #tpu.memory_space<vmem>>) attributes {dimension_semantics = [#tpu.dimension_semantics<parallel>], iteration_bounds = array<i64: 1>, scalar_prefetch = 0 : i64, scratch_operands = 0 : i64, tpu.core_type = #tpu.core_type<tc>, window_params = [{transform_indices = @transform_0, window_bounds = array<i64: 8, 32>}, {pipeline_mode = #tpu.pipeline_mode<synchronous>, transform_indices = @transform_1, window_bounds = array<i64: 32, 128>}, {pipeline_mode = #tpu.pipeline_mode<synchronous>, transform_indices = @transform_2, window_bounds = array<i64: 1, 128>}, {transform_indices = @transform_3, window_bounds = array<i64: 8, 128>}]} {
    %c0 = arith.constant 0 : index
    %c0_0 = arith.constant 0 : index
    %0 = vector.load %arg1[%c0, %c0_0] : memref<8x32xf32, #tpu.memory_space<vmem>>, vector<8x32xf32>
    %c0_1 = arith.constant 0 : index
    %c0_2 = arith.constant 0 : index
    %1 = vector.load %arg2[%c0_1, %c0_2] : memref<32x128xf32, #tpu.memory_space<vmem>>, vector<32x128xf32>
    %cst = arith.constant dense<0.000000e+00> : vector<8x128xf32>
    %2 = tpu.matmul %0, %1, %cst {dimension_numbers = #tpu.dot_dimension_numbers<[1], [0], [0], [1], [0, 0, 1, 1], [], []>} : vector<8x32xf32>, vector<32x128xf32>, vector<8x128xf32> -> vector<8x128xf32>
    %c0_3 = arith.constant 0 : index
    %c0_4 = arith.constant 0 : index
    %3 = vector.load %arg3[%c0_3, %c0_4] : memref<1x128xf32, #tpu.memory_space<vmem>>, vector<1x128xf32>
    %4 = vector.broadcast %3 : vector<1x128xf32> to vector<8x128xf32>
    %5 = arith.addf %2, %4 : vector<8x128xf32>
    %6 = tpu.iota {dimensions = array<i32: 1>} : vector<1x128xi32>
    %c4_i32 = arith.constant 4 : i32
    %7 = vector.broadcast %c4_i32 : i32 to vector<1x128xi32>
    %8 = arith.cmpi slt, %6, %7 : vector<1x128xi32>
    %9 = arith.negf %5 : vector<8x128xf32>
    %10 = math.exp %9 : vector<8x128xf32>
    %cst_5 = arith.constant 1.000000e+00 : f32
    %11 = vector.broadcast %cst_5 : f32 to vector<8x128xf32>
    %12 = arith.addf %11, %10 : vector<8x128xf32>
    %13 = arith.divf %11, %12 : vector<8x128xf32>
    %14 = vector.shape_cast %8 : vector<1x128xi1> to vector<1x128xi1>
    %15 = vector.broadcast %14 : vector<1x128xi1> to vector<8x128xi1>
    %16 = arith.select %15, %13, %5 : vector<8x128xi1>, vector<8x128xf32>
    %c0_6 = arith.constant 0 : index
    %c0_7 = arith.constant 0 : index
    %17 = vector.load %arg4[%c0_6, %c0_7] : memref<8x128xf32, #tpu.memory_space<vmem>>, vector<8x128xf32>
    tpu.vector_store %arg4[%c0_6, %c0_7], %16 {strides = array<i32>} : memref<8x128xf32, #tpu.memory_space<vmem>>, vector<8x128xf32>,
    return
  }
  func.func @transform_0(%arg0: i32) -> (i32, i32) {
    %c0_i32 = arith.constant 0 : i32
    %c0_i32_0 = arith.constant 0 : i32
    return %arg0, %c0_i32 : i32, i32
  }
  func.func @transform_1(%arg0: i32) -> (i32, i32) {
    %c0_i32 = arith.constant 0 : i32
    %c0_i32_0 = arith.constant 0 : i32
    %c0_i32_1 = arith.constant 0 : i32
    return %c0_i32, %c0_i32_0 : i32, i32
  }
  func.func @transform_2(%arg0: i32) -> (i32, i32) {
    %c0_i32 = arith.constant 0 : i32
    %c0_i32_0 = arith.constant 0 : i32
    %c0_i32_1 = arith.constant 0 : i32
    return %c0_i32, %c0_i32_0 : i32, i32
  }
  func.func @transform_3(%arg0: i32) -> (i32, i32) {
    %c0_i32 = arith.constant 0 : i32
    %c0_i32_0 = arith.constant 0 : i32
    return %arg0, %c0_i32 : i32, i32
  }
}

</mosaic_0001>

<llo_original>
// kernel: tpu_custom_call.1
$region0: #{tpu_custom_call.1}
  #allocation0 [shape = 'u32[]', space=smem, size = 0x4, offset = 0x4, fixed_abs, tag = 'smem constant byte address 0x4 - core index']
  #allocation1 [shape = 'u32[144,128]{1,0:T(1,128)}', space=vmem, size = 0x12000, scoped, tag = 'internal scratch']
  %s0 = inlined_call_operand.hbm [shape: f32[8,32], index: 0, kind: input, shape index: {}]
  %s1 = inlined_call_operand.hbm [shape: f32[32,128], index: 1, kind: input, shape index: {}]
  %s2 = inlined_call_operand.vmem [shape: f32[1,128], index: 2, kind: input, shape index: {}]
  %s3 = inlined_call_operand.hbm [shape: f32[8,128], index: 3, kind: output, shape index: {}]
  %s4 = sld [smem:[#allocation0]]
  $region30: #{tpu_custom_call.1} parent=0
    _
  %s6 = ssub.s32 1, %s4
  %s7 = scalar_select 0, %s6, %s4
  $region1: #{tpu_custom_call.1} parent=0
    #allocation2 [shape = 'u8[4096]{0}', space=vmem, size = 0x1000, scoped, tag = 'input window, operand 0, single buffered']
    #allocation3 [shape = 's32[1]{0}', space=sflag, size = 0x4, scoped, tag = 'scoped memory for tpu_custom_call.1']
    #allocation4 [shape = 's32[1]{0}', space=sflag, size = 0x4, scoped, tag = 'scoped memory for tpu_custom_call.1']
    #allocation5 [shape = 'u8[16384]{0}', space=vmem, size = 0x4000, scoped, tag = 'input window, operand 1, single buffered']
    #allocation6 [shape = 's32[1]{0}', space=sflag, size = 0x4, scoped, tag = 'scoped memory for tpu_custom_call.1']
    #allocation7 [shape = 'u8[4096]{0}', space=vmem, size = 0x1000, scoped, tag = 'output window, operand 0, single buffered']
    %8 = vsyncpa [#allocation3], 0
    %9 = vsyncpa [#allocation6], 0
    %10 = vsyncpa [#allocation4], 0
    // Predicated region
    $region2: #{tpu_custom_call.1} parent=1 // pred_check
      _
    $region3: #{tpu_custom_call.1} parent=1 // pred_check_branch
      %12 = sbr.rel (0) target = $region5
    $region4: #{tpu_custom_call.1} parent=1 // pred_region
      %s14 = ssub.s32 128, 128
      %15 = vsyncadd [#allocation3], %s14
      %s17 = sshll.u32 [#allocation2], 4
      %s18 = int_to_ptr.vmem [resolvable:$true] %s17
      %20 = dma.hbm_to_vmem [thread:$0]  %s0, 128, %s18, [#allocation3]
    $region5: #{tpu_custom_call.1} parent=1 // pred_fallthru
      _
    // Predicated region
    $region6: #{tpu_custom_call.1} parent=1 // pred_check
      _
    $region7: #{tpu_custom_call.1} parent=1 // pred_check_branch
      %22 = sbr.rel (0) target = $region9
    $region8: #{tpu_custom_call.1} parent=1 // pred_region
      %s24 = ssub.s32 512, 512
      %25 = vsyncadd [#allocation6], %s24
      %s26 = sshll.u32 [#allocation5], 4
      %s27 = int_to_ptr.vmem [resolvable:$true] %s26
      %32 = dma.hbm_to_vmem [thread:$0]  %s1, 512, %s27, [#allocation6], 128, 128, 8
    $region9: #{tpu_custom_call.1} parent=1 // pred_fallthru
      _
    // Predicated region
    $region10: #{tpu_custom_call.1} parent=1 // pred_check
      _
    $region11: #{tpu_custom_call.1} parent=1 // pred_check_branch
      %34 = sbr.rel (0) target = $region13
    $region12: #{tpu_custom_call.1} parent=1 // pred_region
      _
    $region13: #{tpu_custom_call.1} parent=1 // pred_fallthru
      _
    // Predicated region
    $region14: #{tpu_custom_call.1} parent=1 // pred_check
      _
    $region15: #{tpu_custom_call.1} parent=1 // pred_check_branch
      %36 = sbr.rel (0) target = $region17
    $region16: #{tpu_custom_call.1} parent=1 // pred_region
      %37 = dma.done [#allocation3], 128
    $region17: #{tpu_custom_call.1} parent=1 // pred_fallthru
      _
    // Predicated region
    $region18: #{tpu_custom_call.1} parent=1 // pred_check
      _
    $region19: #{tpu_custom_call.1} parent=1 // pred_check_branch
      %39 = sbr.rel (0) target = $region21
    $region20: #{tpu_custom_call.1} parent=1 // pred_region
      %40 = dma.done [#allocation6], 512
    $region21: #{tpu_custom_call.1} parent=1 // pred_fallthru
      _
    %v41 = vld [vmem:[#allocation2] sm:$0xff]
    %v42 = vld [vmem:[#allocation5] sm:$0xff]
    %v43 = vld [vmem:[#allocation5 + $0x8] sm:$0xff]
    %v44 = vld [vmem:[#allocation5 + $0x10] sm:$0xff]
    %v45 = vld [vmem:[#allocation5 + $0x18] sm:$0xff]
    %v46 = vld [vmem:[%s2] sm:$0x1]
    %v48 = vlaneseq
    %v49 = vshrl.u32 %v48, 7
    %v50 = vsub.s32 0, %v49
    %v51 = vrot.slane %v46, %v50
    %vm53 = vcmask 261120
    %v55 = vsel %vm53, %v41, 0
    %57 = vmatprep.subr.mxu0 0.0
    %58 = vmatpush1.msra.mxu0 0.0
    %59 = vmatprep.subr.mxu0 0.0
    %60 = vmatpush1.msra.mxu0 0.0
    %61 = vmatprep.subr.mxu0 0.0
    %62 = vmatpush1.msra.mxu0 0.0
    %63 = vmatprep.subr.mxu0 0.0
    %64 = vmatpush1.msra.mxu0 0.0
    %65 = vmatprep.subr.mxu0 0.0
    %66 = vmatpush1.msra.mxu0 0.0
    %67 = vmatprep.subr.mxu0 0.0
    %68 = vmatpush1.msra.mxu0 0.0
    %69 = vmatprep.subr.mxu0 0.0
    %70 = vmatpush1.msra.mxu0 0.0
    %71 = vmatprep.subr.mxu0 0.0
    %72 = vmatpush1.msra.mxu0 0.0
    %73 = vmatprep.subr.mxu0 0.0
    %74 = vmatpush1.msra.mxu0 0.0
    %75 = vmatprep.subr.mxu0 0.0
    %76 = vmatpush1.msra.mxu0 0.0
    %77 = vmatprep.subr.mxu0 0.0
    %78 = vmatpush1.msra.mxu0 0.0
    %79 = vmatprep.subr.mxu0 0.0
    %80 = vmatpush1.msra.mxu0 0.0
    %81 = vmatprep.subr.mxu0 0.0
    %82 = vmatpush1.msra.mxu0 %v45
    %83 = vmatprep.subr.mxu0 0.0
    %84 = vmatpush1.msra.mxu0 %v44
    %85 = vmatprep.subr.mxu0 0.0
    %86 = vmatpush1.msra.mxu0 %v43
    %87 = vmatprep.subr.mxu0 0.0
    %88 = vmatpush1.msra.mxu0 %v42
    %89 = vmatprep.subr.mxu0 0.0
    %90 = vmatpush2.msra.mxu0 0.0
    %91 = vmatprep.subr.mxu0 0.0
    %92 = vmatpush2.msra.mxu0 0.0
    %93 = vmatprep.subr.mxu0 0.0
    %94 = vmatpush2.msra.mxu0 0.0
    %95 = vmatprep.subr.mxu0 0.0
    %96 = vmatpush2.msra.mxu0 0.0
    %97 = vmatprep.subr.mxu0 0.0
    %98 = vmatpush2.msra.mxu0 0.0
    %99 = vmatprep.subr.mxu0 0.0
    %100 = vmatpush2.msra.mxu0 0.0
    %101 = vmatprep.subr.mxu0 0.0
    %102 = vmatpush2.msra.mxu0 0.0
    %103 = vmatprep.subr.mxu0 0.0
    %104 = vmatpush2.msra.mxu0 0.0
    %105 = vmatprep.subr.mxu0 0.0
    %106 = vmatpush2.msra.mxu0 0.0
    %107 = vmatprep.subr.mxu0 0.0
    %108 = vmatpush2.msra.mxu0 0.0
    %109 = vmatprep.subr.mxu0 0.0
    %110 = vmatpush2.msra.mxu0 0.0
    %111 = vmatprep.subr.mxu0 0.0
    %112 = vmatpush2.msra.mxu0 0.0
    %113 = vmatprep.subr.mxu0 0.0
    %114 = vmatpush2.msra.mxu0 0.0
    %115 = vmatprep.subr.mxu0 0.0
    %116 = vmatpush2.msra.mxu0 0.0
    %117 = vmatprep.subr.mxu0 0.0
    %118 = vmatpush2.msra.mxu0 0.0
    %119 = vmatprep.subr.mxu0 0.0
    %120 = vmatpush2.msra.mxu0 0.0
    %121 = vmatprep.mubr.f32.mxu0 0.0
    %122 = vmatmul.mubr.f32.gmra.mxu0 %v55
    %v123 = vpop.f32.mrf.mxu0
    %v124 = vadd.f32 %v51, %v123
    %v125 = vpop.f32.mrf.mxu0
    %126 = vdwg.mxu0
    %v127 = vlaneseq
    %v128 = vand.u32 %v127, 127
    %vm129 = vcmp.lt.s32.totalorder %v128, 4
    %v130 = vxor.u32 %v124, 2147483648
    %v131 = vmul.f32 %v130, 1.442695
    %v132 = vpow.pop %v131
    %v133 = vadd.f32 %v132, 1.0
    %v134 = vrcp.pop %v133
    %v135 = vmul.f32 1.0, %v134
    %v136 = vsel %vm129, 1, 0
    %vm137 = vcmp.eq.s32.totalorder %v136, 1
    %v138 = vsel %vm137, %v135, %v124
    %139 = vst [vmem:[#allocation7] sm:$0xff] %v138
    // Predicated region
    $region22: #{tpu_custom_call.1} parent=1 // pred_check
      _
    $region23: #{tpu_custom_call.1} parent=1 // pred_check_branch
      %141 = sbr.rel (0) target = $region25
    $region24: #{tpu_custom_call.1} parent=1 // pred_region
      %s143 = ssub.s32 128, 128
      %144 = vsyncadd [#allocation4], %s143
      %s146 = sshll.u32 [#allocation7], 4
      %s147 = int_to_ptr.vmem [resolvable:$true] %s146
      %149 = dma.vmem_to_hbm [thread:$0]  %s147, 128, %s3, [#allocation4]
    $region25: #{tpu_custom_call.1} parent=1 // pred_fallthru
      _
    // Predicated region
    $region26: #{tpu_custom_call.1} parent=1 // pred_check
      _
    $region27: #{tpu_custom_call.1} parent=1 // pred_check_branch
      %151 = sbr.rel (0) target = $region29
    $region28: #{tpu_custom_call.1} parent=1 // pred_region
      %152 = dma.done [#allocation4], 128
    $region29: #{tpu_custom_call.1} parent=1 // pred_fallthru
      _
    %153 = vsyncpa [#allocation3], 1
    %154 = vsyncpa [#allocation6], 1
    %155 = vsyncpa [#allocation4], 1

</llo_original>
